<compile_context>
chip_gen: v6e
topology: v6e:2x2x1
jax: 0.10.0
libtpu: 0.0.40
codegen_flags: <defaults>
</compile_context>

<pallas_src>
import functools

import jax
import jax.numpy as jnp
from jax.experimental import pallas as pl
from jax.experimental.pallas import tpu as pltpu


def _pick_vmem_limit():
    """Scoped-VMEM budget per TPU generation (v7x has only 64 MiB physical VMEM)."""
    kind = ""
    try:
        kind = jax.devices()[0].device_kind.lower()
    except Exception:
        pass
    if "v7" in kind or "7x" in kind:
        return 48 * 1024 * 1024
    if "v5" in kind or "v6" in kind:
        return 96 * 1024 * 1024
    return 32 * 1024 * 1024  # conservative fallback


VMEM_LIMIT_BYTES = _pick_vmem_limit()
NEG_FILL = -1e30


# ----------------------------------------------------------------------------
# Kernel 1: plain linear layer (look_up_table feature projections)
# ----------------------------------------------------------------------------
def _linear_kernel(x_ref, w_ref, b_ref, o_ref):
    o_ref[...] = (
        jnp.dot(x_ref[...], w_ref[...], preferred_element_type=jnp.float32)
        + b_ref[...]
    )


def linear(x, w, b):
    m, k = x.shape
    _, l = w.shape
    b2 = b.reshape(1, l)
    return pl.pallas_call(
        _linear_kernel,
        out_shape=jax.ShapeDtypeStruct((m, l), jnp.float32),
        grid=(1,),
        in_specs=[
            pl.BlockSpec((m, k), lambda i: (0, 0)),
            pl.BlockSpec((k, l), lambda i: (0, 0)),
            pl.BlockSpec((1, l), lambda i: (0, 0)),
        ],
        out_specs=pl.BlockSpec((m, l), lambda i: (0, 0)),
    )(x, w, b2)


# ----------------------------------------------------------------------------
# Kernel 2: fused per-layer projection (graph independent), row-tiled.
#   z = x_bf16 @ [W | W_res | w_el | w_er]  ->  h (bf16), [resval | el | er] (f32)
# ----------------------------------------------------------------------------
def _proj_kernel(x_ref, w_ref, h_ref, rest_ref, *, hd):
    z = jnp.dot(x_ref[...], w_ref[...], preferred_element_type=jnp.float32)
    h_ref[...] = z[:, :hd].astype(jnp.bfloat16)
    rest_ref[...] = z[:, hd:]


def hgn_project(x, w_cat, *, num_heads, head_dim, tile):
    n, fin = x.shape
    hd = num_heads * head_dim
    wtot = w_cat.shape[1]  # 2*hd + 2*num_heads
    assert n % tile == 0
    x16 = x.astype(jnp.bfloat16)
    h, rest = pl.pallas_call(
        functools.partial(_proj_kernel, hd=hd),
        out_shape=(
            jax.ShapeDtypeStruct((n, hd), jnp.bfloat16),
            jax.ShapeDtypeStruct((n, hd + 2 * num_heads), jnp.float32),
        ),
        grid=(n // tile,),
        in_specs=[
            pl.BlockSpec((tile, fin), lambda i: (i, 0)),
            pl.BlockSpec((fin, wtot), lambda i: (0, 0)),
        ],
        out_specs=(
            pl.BlockSpec((tile, hd), lambda i: (i, 0)),
            pl.BlockSpec((tile, hd + 2 * num_heads), lambda i: (i, 0)),
        ),
        compiler_params=pltpu.CompilerParams(
            dimension_semantics=("parallel",),
            vmem_limit_bytes=VMEM_LIMIT_BYTES),
    )(x16, w_cat)
    resval = rest[:, :hd]
    el = rest[:, hd:hd + num_heads]
    er_t = jnp.transpose(rest[:, hd + num_heads:])  # [H, N] - tiny layout plumbing
    return h, resval, el, er_t


def prepare_layer(p, *, num_heads, head_dim, edge_dim):
    """Graph-independent weight prep done once per layer (shared by both graphs)."""
    fin = p["W"].shape[0]
    w3 = p["W"].reshape(fin, num_heads, head_dim)
    w_el = jnp.einsum("fhd,hd->fh", w3, p["a_l"])
    w_er = jnp.einsum("fhd,hd->fh", w3, p["a_r"])
    w_cat = jnp.concatenate([p["W"], p["W_res"], w_el, w_er],
                            axis=1).astype(jnp.bfloat16)
    # ee[h, e] = a_e[h] . (edge_emb @ W_r)[e, head h] - tiny, lives in SMEM.
    ef = (p["edge_emb"] @ p["W_r"]).reshape(-1, num_heads, edge_dim)
    ee = jnp.einsum("ehd,hd->he", ef, p["a_e"]).astype(jnp.float32)
    return {"w_cat": w_cat, "ee": ee, "bias": p["bias"]}


# ----------------------------------------------------------------------------
# Shared per-block logits helper (edge-type masks consumed one at a time,
# adjacency mask hoisted by the caller).
# ----------------------------------------------------------------------------
def _block_logits(mask, et, el_col, er_row, ee_ref, hh, num_etypes, negative_slope):
    lg = el_col + er_row                      # [TD, TS]
    for e in range(num_etypes):
        lg = lg + jnp.where(et == (e + 1), ee_ref[hh, e], 0.0)
    lg = jnp.where(lg >= 0.0, lg, negative_slope * lg)       # LeakyReLU
    return jnp.where(mask, lg, NEG_FILL)


def _elu(x):
    return jnp.where(x > 0.0, x, jnp.exp(jnp.minimum(x, 0.0)) - 1.0)


# ----------------------------------------------------------------------------
# Kernel 3a: flash-style attention (online softmax), no attention output.
#   grid = (n/TILE_D "parallel", n/TILE_S "arbitrary")
#   beta residual: out = (1-beta) * softmax_agg + beta * res_agg (decomposed).
# ----------------------------------------------------------------------------
def _hgn_attn_flash_kernel(*refs, num_heads, head_dim, num_etypes, beta,
                           negative_slope, apply_act, use_res):
    it = iter(refs)
    ae_ref = next(it)       # [TD, TS] int8 packed adj/etype
    h_ref = next(it)        # [TS, H*D] bf16 (source block)
    el_ref = next(it)       # [TD, H]
    ert_ref = next(it)      # [H, TS]
    resval_ref = next(it)   # [TD, H*D]
    bias_ref = next(it)     # [1, H*D]
    ee_ref = next(it)       # [H, E] SMEM
    res_ref = next(it) if use_res else None   # [H, TD, TS] bf16
    out_ref = next(it)      # [TD, H*D]
    m_sc = next(it)         # [TD, H] f32
    l_sc = next(it)         # [TD, H] f32
    acc_sc = next(it)       # [TD, H*D] f32
    racc_sc = next(it) if use_res else None

    j = pl.program_id(1)
    nj = pl.num_programs(1)

    @pl.when(j == 0)
    def _():
        m_sc[...] = jnp.full(m_sc.shape, -jnp.inf, jnp.float32)
        l_sc[...] = jnp.zeros(l_sc.shape, jnp.float32)
        acc_sc[...] = jnp.zeros(acc_sc.shape, jnp.float32)
        if use_res:
            racc_sc[...] = jnp.zeros(racc_sc.shape, jnp.float32)

    ae = ae_ref[...].astype(jnp.int32)
    mask = ae > 0                       # hoisted adjacency mask
    h_blk = h_ref[...]                  # bf16

    for hh in range(num_heads):
        sl = slice(hh * head_dim, (hh + 1) * head_dim)
        lg = _block_logits(mask, ae, el_ref[:, hh:hh + 1], ert_ref[hh:hh + 1, :],
                           ee_ref, hh, num_etypes, negative_slope)
        m_prev = m_sc[:, hh:hh + 1]
        m_new = jnp.maximum(m_prev, jnp.max(lg, axis=1, keepdims=True))
        corr = jnp.exp(m_prev - m_new)
        p = jnp.where(mask, jnp.exp(lg - m_new), 0.0)
        l_sc[:, hh:hh + 1] = corr * l_sc[:, hh:hh + 1] + jnp.sum(
            p, axis=1, keepdims=True)
        m_sc[:, hh:hh + 1] = m_new
        acc_sc[:, sl] = corr * acc_sc[:, sl] + jnp.dot(
            p.astype(jnp.bfloat16), h_blk[:, sl],
            preferred_element_type=jnp.float32)
        if use_res:
            racc_sc[:, sl] = racc_sc[:, sl] + jnp.dot(
                res_ref[hh], h_blk[:, sl], preferred_element_type=jnp.float32)

    @pl.when(j == nj - 1)
    def _():
        cols = []
        for hh in range(num_heads):
            sl = slice(hh * head_dim, (hh + 1) * head_dim)
            inv_l = 1.0 / jnp.maximum(l_sc[:, hh:hh + 1], 1e-30)
            a = acc_sc[:, sl] * inv_l
            if use_res:
                a = (1.0 - beta) * a + beta * racc_sc[:, sl]
            cols.append(a)
        out = cols[0] if num_heads == 1 else jnp.concatenate(cols, axis=1)
        out = out + resval_ref[...] + bias_ref[...]
        if apply_act:
            out = _elu(out)
        out_ref[...] = out.astype(out_ref.dtype)


def hgn_attention_flash(adj_et, h, el, er_t, resval, bias, ee, res_attn, *,
                        num_heads, head_dim, num_etypes, beta, negative_slope,
                        apply_act, tile_d, tile_s):
    n = adj_et.shape[0]
    hd = num_heads * head_dim
    assert n % tile_d == 0 and n % tile_s == 0
    use_res = res_attn is not None
    kernel = functools.partial(
        _hgn_attn_flash_kernel, num_heads=num_heads, head_dim=head_dim,
        num_etypes=num_etypes, beta=beta, negative_slope=negative_slope,
        apply_act=apply_act, use_res=use_res)

    in_specs = [
        pl.BlockSpec((tile_d, tile_s), lambda i, j: (i, j)),        # adj_et
        pl.BlockSpec((tile_s, hd), lambda i, j: (j, 0)),            # h (src block)
        pl.BlockSpec((tile_d, num_heads), lambda i, j: (i, 0)),     # el (dst)
        pl.BlockSpec((num_heads, tile_s), lambda i, j: (0, j)),     # er_t (src)
        pl.BlockSpec((tile_d, hd), lambda i, j: (i, 0)),            # resval (dst)
        pl.BlockSpec((1, hd), lambda i, j: (0, 0)),                 # bias
        pl.BlockSpec(memory_space=pltpu.MemorySpace.SMEM),          # ee
    ]
    args = [adj_et, h, el, er_t, resval, bias, ee]
    scratch = [pltpu.VMEM((tile_d, num_heads), jnp.float32),
               pltpu.VMEM((tile_d, num_heads), jnp.float32),
               pltpu.VMEM((tile_d, hd), jnp.float32)]
    if use_res:
        in_specs.append(
            pl.BlockSpec((num_heads, tile_d, tile_s), lambda i, j: (0, i, j)))
        args.append(res_attn)
        scratch.append(pltpu.VMEM((tile_d, hd), jnp.float32))

    return pl.pallas_call(
        kernel,
        out_shape=jax.ShapeDtypeStruct((n, hd), jnp.float32),
        grid=(n // tile_d, n // tile_s),
        in_specs=in_specs,
        out_specs=pl.BlockSpec((tile_d, hd), lambda i, j: (i, 0)),
        scratch_shapes=scratch,
        compiler_params=pltpu.CompilerParams(
            dimension_semantics=("parallel", "arbitrary"),
            vmem_limit_bytes=VMEM_LIMIT_BYTES),
    )(*args)


# ----------------------------------------------------------------------------
# Kernel 3b: softmax row statistics (m, l) - used only when the layer must
#            return its attention matrix (bf16 residual attention).
# ----------------------------------------------------------------------------
def _hgn_stats_kernel(ae_ref, el_ref, ert_ref, ee_ref, m_out, l_out, m_sc, l_sc, *,
                      num_heads, num_etypes, negative_slope):
    j = pl.program_id(1)
    nj = pl.num_programs(1)

    @pl.when(j == 0)
    def _():
        m_sc[...] = jnp.full(m_sc.shape, -jnp.inf, jnp.float32)
        l_sc[...] = jnp.zeros(l_sc.shape, jnp.float32)

    ae = ae_ref[...].astype(jnp.int32)
    mask = ae > 0
    for hh in range(num_heads):
        lg = _block_logits(mask, ae, el_ref[:, hh:hh + 1], ert_ref[hh:hh + 1, :],
                           ee_ref, hh, num_etypes, negative_slope)
        m_prev = m_sc[:, hh:hh + 1]
        m_new = jnp.maximum(m_prev, jnp.max(lg, axis=1, keepdims=True))
        p = jnp.where(mask, jnp.exp(lg - m_new), 0.0)
        l_sc[:, hh:hh + 1] = jnp.exp(m_prev - m_new) * l_sc[:, hh:hh + 1] + jnp.sum(
            p, axis=1, keepdims=True)
        m_sc[:, hh:hh + 1] = m_new

    @pl.when(j == nj - 1)
    def _():
        m_out[...] = m_sc[...]
        l_out[...] = jnp.maximum(l_sc[...], 1e-30)


def hgn_softmax_stats(adj_et, el, er_t, ee, *, num_heads, num_etypes,
                      negative_slope, tile_d, tile_s):
    n = adj_et.shape[0]
    kernel = functools.partial(_hgn_stats_kernel, num_heads=num_heads,
                               num_etypes=num_etypes,
                               negative_slope=negative_slope)
    return pl.pallas_call(
        kernel,
        out_shape=(jax.ShapeDtypeStruct((n, num_heads), jnp.float32),
                   jax.ShapeDtypeStruct((n, num_heads), jnp.float32)),
        grid=(n // tile_d, n // tile_s),
        in_specs=[
            pl.BlockSpec((tile_d, tile_s), lambda i, j: (i, j)),
            pl.BlockSpec((tile_d, num_heads), lambda i, j: (i, 0)),
            pl.BlockSpec((num_heads, tile_s), lambda i, j: (0, j)),
            pl.BlockSpec(memory_space=pltpu.MemorySpace.SMEM),
        ],
        out_specs=(pl.BlockSpec((tile_d, num_heads), lambda i, j: (i, 0)),
                   pl.BlockSpec((tile_d, num_heads), lambda i, j: (i, 0))),
        scratch_shapes=[pltpu.VMEM((tile_d, num_heads), jnp.float32),
                        pltpu.VMEM((tile_d, num_heads), jnp.float32)],
        compiler_params=pltpu.CompilerParams(
            dimension_semantics=("parallel", "arbitrary"),
            vmem_limit_bytes=VMEM_LIMIT_BYTES),
    )(adj_et, el, er_t, ee)


# ----------------------------------------------------------------------------
# Kernel 3c: exact-softmax attention with attention output (uses precomputed
#            m, l), aggregates h and writes alpha blocks in bf16.
# ----------------------------------------------------------------------------
def _hgn_attn_exact_kernel(*refs, num_heads, head_dim, num_etypes, beta,
                           negative_slope, apply_act, use_res):
    it = iter(refs)
    ae_ref = next(it)        # [TD, TS] int8
    h_ref = next(it)         # [TS, H*D] bf16
    el_ref = next(it)        # [TD, H]
    ert_ref = next(it)       # [H, TS]
    m_ref = next(it)         # [TD, H] (final row max)
    l_ref = next(it)         # [TD, H] (final row sum)
    resval_ref = next(it)    # [TD, H*D]
    bias_ref = next(it)      # [1, H*D]
    ee_ref = next(it)        # [H, E] SMEM
    res_ref = next(it) if use_res else None   # [H, TD, TS] bf16
    out_ref = next(it)       # [TD, H*D]
    attn_ref = next(it)      # [H, TD, TS] bf16
    acc_sc = next(it)        # [TD, H*D] f32

    j = pl.program_id(1)
    nj = pl.num_programs(1)

    @pl.when(j == 0)
    def _():
        acc_sc[...] = jnp.zeros(acc_sc.shape, jnp.float32)

    ae = ae_ref[...].astype(jnp.int32)
    mask = ae > 0
    h_blk = h_ref[...]

    for hh in range(num_heads):
        sl = slice(hh * head_dim, (hh + 1) * head_dim)
        lg = _block_logits(mask, ae, el_ref[:, hh:hh + 1], ert_ref[hh:hh + 1, :],
                           ee_ref, hh, num_etypes, negative_slope)
        inv_l = 1.0 / l_ref[:, hh:hh + 1]
        alpha = jnp.where(mask, jnp.exp(lg - m_ref[:, hh:hh + 1]) * inv_l, 0.0)
        if use_res:
            alpha = (1.0 - beta) * alpha + beta * res_ref[hh].astype(jnp.float32)
        alpha16 = alpha.astype(jnp.bfloat16)
        attn_ref[hh] = alpha16
        acc_sc[:, sl] = acc_sc[:, sl] + jnp.dot(
            alpha16, h_blk[:, sl], preferred_element_type=jnp.float32)

    @pl.when(j == nj - 1)
    def _():
        out = acc_sc[...] + resval_ref[...] + bias_ref[...]
        if apply_act:
            out = _elu(out)
        out_ref[...] = out.astype(out_ref.dtype)


def hgn_attention_with_attn(adj_et, h, el, er_t, m, lsum, resval, bias, ee,
                            res_attn, *, num_heads, head_dim, num_etypes, beta,
                            negative_slope, apply_act, tile_d, tile_s):
    n = adj_et.shape[0]
    hd = num_heads * head_dim
    use_res = res_attn is not None
    kernel = functools.partial(
        _hgn_attn_exact_kernel, num_heads=num_heads, head_dim=head_dim,
        num_etypes=num_etypes, beta=beta, negative_slope=negative_slope,
        apply_act=apply_act, use_res=use_res)

    in_specs = [
        pl.BlockSpec((tile_d, tile_s), lambda i, j: (i, j)),        # adj_et
        pl.BlockSpec((tile_s, hd), lambda i, j: (j, 0)),            # h
        pl.BlockSpec((tile_d, num_heads), lambda i, j: (i, 0)),     # el
        pl.BlockSpec((num_heads, tile_s), lambda i, j: (0, j)),     # er_t
        pl.BlockSpec((tile_d, num_heads), lambda i, j: (i, 0)),     # m
        pl.BlockSpec((tile_d, num_heads), lambda i, j: (i, 0)),     # l
        pl.BlockSpec((tile_d, hd), lambda i, j: (i, 0)),            # resval
        pl.BlockSpec((1, hd), lambda i, j: (0, 0)),                 # bias
        pl.BlockSpec(memory_space=pltpu.MemorySpace.SMEM),          # ee
    ]
    args = [adj_et, h, el, er_t, m, lsum, resval, bias, ee]
    if use_res:
        in_specs.append(
            pl.BlockSpec((num_heads, tile_d, tile_s), lambda i, j: (0, i, j)))
        args.append(res_attn)

    out, attn = pl.pallas_call(
        kernel,
        out_shape=(jax.ShapeDtypeStruct((n, hd), jnp.float32),
                   jax.ShapeDtypeStruct((num_heads, n, n), jnp.bfloat16)),
        grid=(n // tile_d, n // tile_s),
        in_specs=in_specs,
        out_specs=(pl.BlockSpec((tile_d, hd), lambda i, j: (i, 0)),
                   pl.BlockSpec((num_heads, tile_d, tile_s),
                                lambda i, j: (0, i, j))),
        scratch_shapes=[pltpu.VMEM((tile_d, hd), jnp.float32)],
        compiler_params=pltpu.CompilerParams(
            dimension_semantics=("parallel", "arbitrary"),
            vmem_limit_bytes=VMEM_LIMIT_BYTES),
    )(*args)
    return out, attn


# ----------------------------------------------------------------------------
# Kernel 4: mapping Linear(2*label_num -> label_num) + softmax (exact division)
# ----------------------------------------------------------------------------
def _mapping_softmax_kernel(l1_ref, l2_ref, w_ref, b_ref, o_ref, *, label_num):
    w = w_ref[...]
    z = (jnp.dot(l1_ref[...], w[:label_num, :], preferred_element_type=jnp.float32)
         + jnp.dot(l2_ref[...], w[label_num:, :], preferred_element_type=jnp.float32)
         + b_ref[...])
    m = jnp.max(z, axis=1, keepdims=True)
    p = jnp.exp(z - m)
    o_ref[...] = p / jnp.sum(p, axis=1, keepdims=True)


def mapping_softmax(l1, l2, w, b, label_num):
    nt = l1.shape[0]
    b2 = b.reshape(1, label_num)
    return pl.pallas_call(
        functools.partial(_mapping_softmax_kernel, label_num=label_num),
        out_shape=jax.ShapeDtypeStruct((nt, label_num), jnp.float32),
        grid=(1,),
        in_specs=[
            pl.BlockSpec((nt, label_num), lambda i: (0, 0)),
            pl.BlockSpec((nt, label_num), lambda i: (0, 0)),
            pl.BlockSpec((2 * label_num, label_num), lambda i: (0, 0)),
            pl.BlockSpec((1, label_num), lambda i: (0, 0)),
        ],
        out_specs=pl.BlockSpec((nt, label_num), lambda i: (0, 0)),
    )(l1, l2, w, b2)


# ----------------------------------------------------------------------------
# Python glue: SimpleHGN stack + SimpleHGN_AUG_P forward
# ----------------------------------------------------------------------------
def simplehgn_model(feat, adj_et, prep_layers, cfg, layer0_proj=None):
    num_layers = cfg["num_layers"]
    beta = cfg["beta"]
    td, ts, tp = cfg["tile_dst"], cfg["tile_src"], cfg["tile_proj"]
    x = feat
    res = None
    for li in range(num_layers):
        pr = prep_layers[li]
        if li == 0 and layer0_proj is not None:
            h, resval, el, er_t = layer0_proj
        else:
            h, resval, el, er_t = hgn_project(
                x, pr["w_cat"], num_heads=cfg["num_heads"],
                head_dim=cfg["hidden_dim"], tile=tp)
        # attention of the last hidden layer is discarded by the reference wiring
        need_attn = (beta != 0.0) and (li < num_layers - 1)
        res_in = res if (beta != 0.0 and li > 0) else None
        common = dict(num_heads=cfg["num_heads"], head_dim=cfg["hidden_dim"],
                      num_etypes=cfg["num_etypes"], beta=beta,
                      negative_slope=cfg["negative_slope"], apply_act=True,
                      tile_d=td, tile_s=ts)
        if need_attn:
            m, lsum = hgn_softmax_stats(
                adj_et, el, er_t, pr["ee"], num_heads=cfg["num_heads"],
                num_etypes=cfg["num_etypes"],
                negative_slope=cfg["negative_slope"], tile_d=td, tile_s=ts)
            x, res = hgn_attention_with_attn(
                adj_et, h, el, er_t, m, lsum, resval, pr["bias"], pr["ee"],
                res_in, **common)
        else:
            x = hgn_attention_flash(
                adj_et, h, el, er_t, resval, pr["bias"], pr["ee"], res_in,
                **common)
            res = None
    # output layer: 1 head of width label_num, no activation, res_attn=None
    pr = prep_layers[num_layers]
    h, resval, el, er_t = hgn_project(
        x, pr["w_cat"], num_heads=1, head_dim=cfg["label_num"], tile=tp)
    logits = hgn_attention_flash(
        adj_et, h, el, er_t, resval, pr["bias"], pr["ee"], None,
        num_heads=1, head_dim=cfg["label_num"], num_etypes=cfg["num_etypes"],
        beta=0.0, negative_slope=cfg["negative_slope"], apply_act=False,
        tile_d=cfg["tile_dst"], tile_s=cfg["tile_src"])
    return logits  # [N, label_num]


def simplehgn_aug_p_forward(node_feats, adj_et_aug, adj_et_ori, params, cfg):
    # per-layer weight prep (graph independent -> shared between both passes)
    prep = []
    for li in range(cfg["num_layers"]):
        prep.append(prepare_layer(params["layers"][li],
                                  num_heads=cfg["num_heads"],
                                  head_dim=cfg["hidden_dim"],
                                  edge_dim=cfg["edge_dim"]))
    prep.append(prepare_layer(params["layers"][cfg["num_layers"]],
                              num_heads=1, head_dim=cfg["label_num"],
                              edge_dim=cfg["edge_dim"]))

    # look_up_table projections (identity for the target category)
    projected = []
    for i, f in enumerate(node_feats):
        if i == cfg["target_idx"]:
            projected.append(f)
        else:
            w, b = params["lookup"][i]
            projected.append(linear(f, w, b))
    feat = jnp.concatenate(projected, axis=0)  # [N, target_feat_size]

    # layer-0 projection is graph-independent: compute once, share aug/ori passes
    proj0 = hgn_project(feat, prep[0]["w_cat"], num_heads=cfg["num_heads"],
                        head_dim=cfg["hidden_dim"], tile=cfg["tile_proj"])

    logits1 = simplehgn_model(feat, adj_et_aug, prep, cfg, layer0_proj=proj0)
    logits2 = simplehgn_model(feat, adj_et_ori, prep, cfg, layer0_proj=proj0)

    nt = cfg["n_target"]
    return mapping_softmax(logits1[:nt], logits2[:nt],
                           params["mapping_w"], params["mapping_b"],
                           cfg["label_num"])


# ----------------------------------------------------------------------------
# Deterministic parameter / input construction
# ----------------------------------------------------------------------------
def make_layer_params(key, fin, num_heads, head_dim, edge_dim, num_etypes):
    ks = jax.random.split(key, 8)
    hd = num_heads * head_dim
    he = num_heads * edge_dim
    s = 0.1
    return {
        "W": s * jax.random.normal(ks[0], (fin, hd), jnp.float32),
        "W_res": s * jax.random.normal(ks[1], (fin, hd), jnp.float32),
        "bias": s * jax.random.normal(ks[2], (1, hd), jnp.float32),
        "a_l": s * jax.random.normal(ks[3], (num_heads, head_dim), jnp.float32),
        "a_r": s * jax.random.normal(ks[4], (num_heads, head_dim), jnp.float32),
        "a_e": s * jax.random.normal(ks[5], (num_heads, edge_dim), jnp.float32),
        "edge_emb": s * jax.random.normal(ks[6], (num_etypes, edge_dim), jnp.float32),
        "W_r": s * jax.random.normal(ks[7], (edge_dim, he), jnp.float32),
    }


def make_graph(key, n, num_etypes_used):
    """Packed int8 structure: adj_et = etype+1 where an edge exists, 0 otherwise.
    Self loops are always injected (every softmax row has a valid entry)."""
    k1, k2 = jax.random.split(key)
    adj = jax.random.uniform(k1, (n, n)) < 0.1
    adj = jnp.logical_or(adj, jnp.eye(n, dtype=jnp.bool_))
    etype = jax.random.randint(k2, (n, n), 0, num_etypes_used)
    return jnp.where(adj, etype + 1, 0).astype(jnp.int8)


if __name__ == "__main__":
    key = jax.random.PRNGKey(0)

    # synthetic config (SimpleHGN_AUG_P with is_augmentation=True)
    feature_sizes = [12, 10, 14]           # 3 node types
    type_counts = [128, 64, 64]            # target type first
    target_idx = 0
    n_total = sum(type_counts)             # 256 nodes
    cfg = dict(
        num_heads=2, num_layers=2, hidden_dim=16, label_num=4,
        edge_dim=8, num_etypes=6,          # len(g1.etypes) + len(g2.etypes)
        negative_slope=0.2, beta=0.05,
        target_idx=target_idx, n_target=type_counts[target_idx],
        # dst/src tiles exercise a real 2-D (parallel x arbitrary) pipelined grid.
        # Production sizing: pick the largest tiles fitting the per-generation VMEM
        # budget formula in the header (e.g. ~256x512 bf16 on v7x, larger on v5e/v6e).
        tile_dst=64, tile_src=128, tile_proj=64,
    )
    target_size = feature_sizes[target_idx]

    # parameters
    kp, kin = jax.random.split(key)
    kps = jax.random.split(kp, 16)
    lookup = []
    for i, sz in enumerate(feature_sizes):
        if i == target_idx:
            lookup.append(None)  # identical_map
        else:
            lookup.append((
                0.1 * jax.random.normal(kps[i], (sz, target_size), jnp.float32),
                0.1 * jax.random.normal(kps[i + 4], (target_size,), jnp.float32),
            ))
    layers = []
    fin = target_size
    for li in range(cfg["num_layers"]):
        layers.append(make_layer_params(kps[8 + li], fin, cfg["num_heads"],
                                        cfg["hidden_dim"], cfg["edge_dim"],
                                        cfg["num_etypes"]))
        fin = cfg["num_heads"] * cfg["hidden_dim"]
    layers.append(make_layer_params(kps[8 + cfg["num_layers"]], fin, 1,
                                    cfg["label_num"], cfg["edge_dim"],
                                    cfg["num_etypes"]))
    params = {
        "lookup": lookup,
        "layers": layers,
        "mapping_w": 0.1 * jax.random.normal(
            kps[12], (2 * cfg["label_num"], cfg["label_num"]), jnp.float32),
        "mapping_b": 0.1 * jax.random.normal(
            kps[13], (cfg["label_num"],), jnp.float32),
    }

    # inputs: per-type node features + two synthetic graphs (augmented / original)
    kf = jax.random.split(kin, 4)
    node_feats = [
        jax.random.normal(kf[i], (type_counts[i], feature_sizes[i]), jnp.float32)
        for i in range(len(feature_sizes))
    ]
    adj_et_aug = make_graph(kf[3], n_total, cfg["num_etypes"])
    adj_et_ori = make_graph(jax.random.PRNGKey(1), n_total, 3)

    out = simplehgn_aug_p_forward(node_feats, adj_et_aug, adj_et_ori, params, cfg)
    out = jax.block_until_ready(out)

    assert out.shape == (cfg["n_target"], cfg["label_num"])
    assert bool(jnp.all(jnp.isfinite(out)))
    assert bool(jnp.allclose(jnp.sum(out, axis=-1), 1.0, atol=1e-4))
    print("KERNEL_OK")
</pallas_src>

<mosaic_0001>
module attributes {stable_mosaic.version = 11 : i64} {
  func.func @_linear_kernel(%arg0: i32, %arg1: memref<64x10xf32, #tpu.memory_space<vmem>>, %arg2: memref<10x12xf32, #tpu.memory_space<vmem>>, %arg3: memref<1x12xf32, #tpu.memory_space<vmem>>, %arg4: memref<64x12xf32, #tpu.memory_space<vmem>>) attributes {dimension_semantics = [#tpu.dimension_semantics<arbitrary>], iteration_bounds = array<i64: 1>, scalar_prefetch = 0 : i64, scratch_operands = 0 : i64, tpu.core_type = #tpu.core_type<tc>, window_params = [{pipeline_mode = #tpu.pipeline_mode<synchronous>, transform_indices = @transform_0, window_bounds = array<i64: 64, 10>}, {pipeline_mode = #tpu.pipeline_mode<synchronous>, transform_indices = @transform_1, window_bounds = array<i64: 10, 12>}, {pipeline_mode = #tpu.pipeline_mode<synchronous>, transform_indices = @transform_2, window_bounds = array<i64: 1, 12>}, {pipeline_mode = #tpu.pipeline_mode<synchronous>, transform_indices = @transform_3, window_bounds = array<i64: 64, 12>}]} {
    %c0 = arith.constant 0 : index
    %c0_0 = arith.constant 0 : index
    %0 = vector.load %arg1[%c0, %c0_0] : memref<64x10xf32, #tpu.memory_space<vmem>>, vector<64x10xf32>
    %c0_1 = arith.constant 0 : index
    %c0_2 = arith.constant 0 : index
    %1 = vector.load %arg2[%c0_1, %c0_2] : memref<10x12xf32, #tpu.memory_space<vmem>>, vector<10x12xf32>
    %cst = arith.constant dense<0.000000e+00> : vector<64x12xf32>
    %2 = tpu.matmul %0, %1, %cst {dimension_numbers = #tpu.dot_dimension_numbers<[1], [0], [0], [1], [0, 0, 1, 1], [], []>} : vector<64x10xf32>, vector<10x12xf32>, vector<64x12xf32> -> vector<64x12xf32>
    %c0_3 = arith.constant 0 : index
    %c0_4 = arith.constant 0 : index
    %3 = vector.load %arg3[%c0_3, %c0_4] : memref<1x12xf32, #tpu.memory_space<vmem>>, vector<1x12xf32>
    %4 = vector.broadcast %3 : vector<1x12xf32> to vector<64x12xf32>
    %5 = arith.addf %2, %4 : vector<64x12xf32>
    %c0_5 = arith.constant 0 : index
    %c0_6 = arith.constant 0 : index
    %6 = vector.load %arg4[%c0_5, %c0_6] : memref<64x12xf32, #tpu.memory_space<vmem>>, vector<64x12xf32>
    tpu.vector_store %arg4[%c0_5, %c0_6], %5 {strides = array<i32>} : memref<64x12xf32, #tpu.memory_space<vmem>>, vector<64x12xf32>,
    return
  }
  func.func @transform_0(%arg0: i32) -> (i32, i32) {
    %c0_i32 = arith.constant 0 : i32
    %c0_i32_0 = arith.constant 0 : i32
    %c0_i32_1 = arith.constant 0 : i32
    return %c0_i32, %c0_i32_0 : i32, i32
  }
  func.func @transform_1(%arg0: i32) -> (i32, i32) {
    %c0_i32 = arith.constant 0 : i32
    %c0_i32_0 = arith.constant 0 : i32
    %c0_i32_1 = arith.constant 0 : i32
    return %c0_i32, %c0_i32_0 : i32, i32
  }
  func.func @transform_2(%arg0: i32) -> (i32, i32) {
    %c0_i32 = arith.constant 0 : i32
    %c0_i32_0 = arith.constant 0 : i32
    %c0_i32_1 = arith.constant 0 : i32
    return %c0_i32, %c0_i32_0 : i32, i32
  }
  func.func @transform_3(%arg0: i32) -> (i32, i32) {
    %c0_i32 = arith.constant 0 : i32
    %c0_i32_0 = arith.constant 0 : i32
    %c0_i32_1 = arith.constant 0 : i32
    return %c0_i32, %c0_i32_0 : i32, i32
  }
}

</mosaic_0001>

<llo_original>
// kernel: tpu_custom_call.1
$region0: #{tpu_custom_call.1}
  #allocation0 [shape = 'u32[]', space=smem, size = 0x4, offset = 0x4, fixed_abs, tag = 'smem constant byte address 0x4 - core index']
  #allocation1 [shape = 'u32[144,128]{1,0:T(1,128)}', space=vmem, size = 0x12000, scoped, tag = 'internal scratch']
  %s0 = inlined_call_operand.vmem [shape: f32[64,10], index: 0, kind: input, shape index: {}]
  %s1 = inlined_call_operand.vmem [shape: f32[10,12], index: 1, kind: input, shape index: {}]
  %s2 = inlined_call_operand.vmem [shape: f32[1,12], index: 2, kind: input, shape index: {}]
  %s3 = inlined_call_operand.vmem [shape: f32[64,12], index: 3, kind: output, shape index: {}]
  %s4 = sld [smem:[#allocation0]]
  $region22: #{tpu_custom_call.1} parent=0
    _
  %s6 = ssub.s32 1, %s4
  %s7 = scalar_select 0, %s6, %s4
  // Predicated region
  $region2: #{tpu_custom_call.1} parent=0 // pred_check
    _
  $region3: #{tpu_custom_call.1} parent=0 // pred_check_branch
    %9 = sbr.rel (0) target = $region5
  $region4: #{tpu_custom_call.1} parent=0 // pred_region
    _
  $region5: #{tpu_custom_call.1} parent=0 // pred_fallthru
    _
  // Predicated region
  $region6: #{tpu_custom_call.1} parent=0 // pred_check
    _
  $region7: #{tpu_custom_call.1} parent=0 // pred_check_branch
    %11 = sbr.rel (0) target = $region9
  $region8: #{tpu_custom_call.1} parent=0 // pred_region
    _
  $region9: #{tpu_custom_call.1} parent=0 // pred_fallthru
    _
  // Predicated region
  $region10: #{tpu_custom_call.1} parent=0 // pred_check
    _
  $region11: #{tpu_custom_call.1} parent=0 // pred_check_branch
    %13 = sbr.rel (0) target = $region13
  $region12: #{tpu_custom_call.1} parent=0 // pred_region
    _
  $region13: #{tpu_custom_call.1} parent=0 // pred_fallthru
    _
  %v14 = vld [vmem:[%s0] sm:$0xff]
  %v15 = vld [vmem:[%s0 + $0x8] sm:$0xff]
  %v16 = vld [vmem:[%s0 + $0x10] sm:$0xff]
  %v17 = vld [vmem:[%s0 + $0x18] sm:$0xff]
  %v18 = vld [vmem:[%s0 + $0x20] sm:$0xff]
  %v19 = vld [vmem:[%s0 + $0x28] sm:$0xff]
  %v20 = vld [vmem:[%s0 + $0x30] sm:$0xff]
  %v21 = vld [vmem:[%s0 + $0x38] sm:$0xff]
  %v22 = vld [vmem:[%s1] sm:$0xff]
  %v23 = vld [vmem:[%s1 + $0x8] sm:$0x3]
  %v24 = vld [vmem:[%s2] sm:$0x1]
  %v26 = vlaneseq
  %v27 = vshrl.u32 %v26, 7
  %v28 = vsub.s32 0, %v27
  %v29 = vrot.slane %v24, %v28
  %vm31 = vcmask 80896
  %v33 = vsel %vm31, %v14, 0
  %v36 = vsel %vm31, %v15, 0
  %v39 = vsel %vm31, %v16, 0
  %v42 = vsel %vm31, %v17, 0
  %v45 = vsel %vm31, %v18, 0
  %v48 = vsel %vm31, %v19, 0
  %v51 = vsel %vm31, %v20, 0
  %v54 = vsel %vm31, %v21, 0
  %vm56 = vcmask 1041408
  %v58 = vsel %vm56, %v23, 0
  %60 = vmatprep.subr.mxu0 0.0
  %61 = vmatpush1.msra.mxu0 0.0
  %62 = vmatprep.subr.mxu0 0.0
  %63 = vmatpush1.msra.mxu0 0.0
  %64 = vmatprep.subr.mxu0 0.0
  %65 = vmatpush1.msra.mxu0 0.0
  %66 = vmatprep.subr.mxu0 0.0
  %67 = vmatpush1.msra.mxu0 0.0
  %68 = vmatprep.subr.mxu0 0.0
  %69 = vmatpush1.msra.mxu0 0.0
  %70 = vmatprep.subr.mxu0 0.0
  %71 = vmatpush1.msra.mxu0 0.0
  %72 = vmatprep.subr.mxu0 0.0
  %73 = vmatpush1.msra.mxu0 0.0
  %74 = vmatprep.subr.mxu0 0.0
  %75 = vmatpush1.msra.mxu0 0.0
  %76 = vmatprep.subr.mxu0 0.0
  %77 = vmatpush1.msra.mxu0 0.0
  %78 = vmatprep.subr.mxu0 0.0
  %79 = vmatpush1.msra.mxu0 0.0
  %80 = vmatprep.subr.mxu0 0.0
  %81 = vmatpush1.msra.mxu0 0.0
  %82 = vmatprep.subr.mxu0 0.0
  %83 = vmatpush1.msra.mxu0 0.0
  %84 = vmatprep.subr.mxu0 0.0
  %85 = vmatpush1.msra.mxu0 0.0
  %86 = vmatprep.subr.mxu0 0.0
  %87 = vmatpush1.msra.mxu0 0.0
  %88 = vmatprep.subr.mxu0 0.0
  %89 = vmatpush1.msra.mxu0 %v58
  %90 = vmatprep.subr.mxu0 0.0
  %91 = vmatpush1.msra.mxu0 %v22
  %92 = vmatprep.subr.mxu0 0.0
  %93 = vmatpush2.msra.mxu0 0.0
  %94 = vmatprep.subr.mxu0 0.0
  %95 = vmatpush2.msra.mxu0 0.0
  %96 = vmatprep.subr.mxu0 0.0
  %97 = vmatpush2.msra.mxu0 0.0
  %98 = vmatprep.subr.mxu0 0.0
  %99 = vmatpush2.msra.mxu0 0.0
  %100 = vmatprep.subr.mxu0 0.0
  %101 = vmatpush2.msra.mxu0 0.0
  %102 = vmatprep.subr.mxu0 0.0
  %103 = vmatpush2.msra.mxu0 0.0
  %104 = vmatprep.subr.mxu0 0.0
  %105 = vmatpush2.msra.mxu0 0.0
  %106 = vmatprep.subr.mxu0 0.0
  %107 = vmatpush2.msra.mxu0 0.0
  %108 = vmatprep.subr.mxu0 0.0
  %109 = vmatpush2.msra.mxu0 0.0
  %110 = vmatprep.subr.mxu0 0.0
  %111 = vmatpush2.msra.mxu0 0.0
  %112 = vmatprep.subr.mxu0 0.0
  %113 = vmatpush2.msra.mxu0 0.0
  %114 = vmatprep.subr.mxu0 0.0
  %115 = vmatpush2.msra.mxu0 0.0
  %116 = vmatprep.subr.mxu0 0.0
  %117 = vmatpush2.msra.mxu0 0.0
  %118 = vmatprep.subr.mxu0 0.0
  %119 = vmatpush2.msra.mxu0 0.0
  %120 = vmatprep.subr.mxu0 0.0
  %121 = vmatpush2.msra.mxu0 0.0
  %122 = vmatprep.subr.mxu0 0.0
  %123 = vmatpush2.msra.mxu0 0.0
  %124 = vmatprep.mubr.f32.mxu0 0.0
  %125 = vmatmul.mubr.f32.gmra.mxu0 %v33
  %v126 = vpop.f32.mrf.mxu0
  %v127 = vadd.f32 %v29, %v126
  %v128 = vpop.f32.mrf.mxu0
  %129 = vmatprep.mubr.f32.mxu0 0.0
  %130 = vmatmul.mubr.f32.gmra.mxu0 %v36
  %v131 = vpop.f32.mrf.mxu0
  %v132 = vadd.f32 %v29, %v131
  %v133 = vpop.f32.mrf.mxu0
  %134 = vmatprep.mubr.f32.mxu0 0.0
  %135 = vmatmul.mubr.f32.gmra.mxu0 %v39
  %v136 = vpop.f32.mrf.mxu0
  %v137 = vadd.f32 %v29, %v136
  %v138 = vpop.f32.mrf.mxu0
  %139 = vmatprep.mubr.f32.mxu0 0.0
  %140 = vmatmul.mubr.f32.gmra.mxu0 %v42
  %v141 = vpop.f32.mrf.mxu0
  %v142 = vadd.f32 %v29, %v141
  %v143 = vpop.f32.mrf.mxu0
  %144 = vmatprep.mubr.f32.mxu0 0.0
  %145 = vmatmul.mubr.f32.gmra.mxu0 %v45
  %v146 = vpop.f32.mrf.mxu0
  %v147 = vadd.f32 %v29, %v146
  %v148 = vpop.f32.mrf.mxu0
  %149 = vmatprep.mubr.f32.mxu0 0.0
  %150 = vmatmul.mubr.f32.gmra.mxu0 %v48
  %v151 = vpop.f32.mrf.mxu0
  %v152 = vadd.f32 %v29, %v151
  %v153 = vpop.f32.mrf.mxu0
  %154 = vmatprep.mubr.f32.mxu0 0.0
  %155 = vmatmul.mubr.f32.gmra.mxu0 %v51
  %v156 = vpop.f32.mrf.mxu0
  %v157 = vadd.f32 %v29, %v156
  %v158 = vpop.f32.mrf.mxu0
  %159 = vmatprep.mubr.f32.mxu0 0.0
  %160 = vmatmul.mubr.f32.gmra.mxu0 %v54
  %v161 = vpop.f32.mrf.mxu0
  %v162 = vadd.f32 %v29, %v161
  %v163 = vpop.f32.mrf.mxu0
  %164 = vdwg.mxu0
  %vm165 = vcmask 97280
  %166 = vst.msk [vmem:[%s3] sm:$0xff] %vm165, %v127
  %167 = vst.msk [vmem:[%s3 + $0x8] sm:$0xff] %vm165, %v132
  %168 = vst.msk [vmem:[%s3 + $0x10] sm:$0xff] %vm165, %v137
  %169 = vst.msk [vmem:[%s3 + $0x18] sm:$0xff] %vm165, %v142
  %170 = vst.msk [vmem:[%s3 + $0x20] sm:$0xff] %vm165, %v147
  %171 = vst.msk [vmem:[%s3 + $0x28] sm:$0xff] %vm165, %v152
  %172 = vst.msk [vmem:[%s3 + $0x30] sm:$0xff] %vm165, %v157
  %173 = vst.msk [vmem:[%s3 + $0x38] sm:$0xff] %vm165, %v162
  // Predicated region
  $region14: #{tpu_custom_call.1} parent=0 // pred_check
    _
  $region15: #{tpu_custom_call.1} parent=0 // pred_check_branch
    %175 = sbr.rel (0) target = $region17
  $region16: #{tpu_custom_call.1} parent=0 // pred_region
    _
  $region17: #{tpu_custom_call.1} parent=0 // pred_fallthru
    _
  // Predicated region
  $region18: #{tpu_custom_call.1} parent=0 // pred_check
    _
  $region19: #{tpu_custom_call.1} parent=0 // pred_check_branch
    %177 = sbr.rel (0) target = $region21
  $region20: #{tpu_custom_call.1} parent=0 // pred_region
    _
  $region21: #{tpu_custom_call.1} parent=0 // pred_fallthru
    _

</llo_original>
